<compile_context>
chip_gen: v5e
topology: v5e:2x2
jax: 0.10.0
libtpu: 0.0.40
codegen_flags: <defaults>
</compile_context>

<pallas_src>
import functools

import jax
import jax.numpy as jnp
from jax.experimental import pallas as pl
from jax.experimental.pallas import tpu as pltpu


def _cse_kernel(x_ref, w1_ref, b1_ref, w2_ref, b2_ref, o_ref):
    # x_ref / o_ref: (TB, C, TL) block of the (B, C, L) tensor (NCL layout).
    w1 = w1_ref[...]            # (H, C)
    b1 = b1_ref[...]            # (H, 1)
    w2 = w2_ref[...]            # (C, H)
    b2 = b2_ref[...]            # (C, 1)
    tb = x_ref.shape[0]
    for b in range(tb):                                   # static, small (<= 8)
        x = x_ref[b]                                      # (C, TL)
        # conv1 (1x1): C -> H, then ReLU.
        h = jnp.dot(w1, x, preferred_element_type=jnp.float32) + b1
        h = jnp.maximum(h, 0.0)                           # (H, TL)
        # conv2 (1x1): H -> C, then Sigmoid (tanh form: single EUP transcendental).
        s = jnp.dot(w2, h, preferred_element_type=jnp.float32) + b2
        s = 0.5 * (jnp.tanh(0.5 * s) + 1.0)               # == sigmoid(s), exact
        # x + x * s  ==  x * (1 + s)
        o_ref[b] = (x * (1.0 + s)).astype(o_ref.dtype)


def _largest_even_tile(L, cap):
    """Largest multiple of 128 <= cap that evenly divides L, else 0."""
    t = (min(cap, L) // 128) * 128
    while t >= 128:
        if L % t == 0:
            return t
        t -= 128
    return 0


def _choose_tiles(B, C, L, itemsize, tl_max, target_block_bytes, tb_max=8):
    """Pick (tb, tl) for the (tb, C, tl) x/out block."""
    row_bytes = C * itemsize
    # Length tile: as big as tl_max / the per-block byte budget allow, lane-dense.
    tl_cap = max(128, (min(tl_max, target_block_bytes // row_bytes) // 128) * 128)
    if L <= tl_cap:
        tl = L                                            # full L per block (always legal)
    else:
        tl = _largest_even_tile(L, tl_cap) or tl_cap      # even cover, else ragged tail
    nl = pl.cdiv(L, tl)

    # Batch fold: only when a single (1, C, tl) block is well under the target.
    block = tl * row_bytes
    tb = max(1, min(B, tb_max, target_block_bytes // max(block, 1)))
    while B % tb:                                         # non-ragged batch tiling
        tb -= 1

    # Guarantee >= 2 grid steps so both v7x TensorCores get work (no-op v5e/v6e).
    if (B // tb) * nl < 2:
        if B >= 2:
            tb = max(1, B // 2)
            while B % tb:
                tb -= 1
        elif L % 256 == 0 and L >= 256:
            tl = L // 2
    return tb, tl


@functools.partial(jax.jit, static_argnames=("tl_max", "target_block_bytes"))
def cse_module(x_ncl, w1, b1, w2, b2, *, tl_max=4096, target_block_bytes=4 << 20):
    """CSE forward in NCL layout.

    x_ncl: (B, C, L).  w1: (H, C), b1: (H,), w2: (C, H), b2: (C,).
    Returns (B, C, L) = x + x * sigmoid(W2 @ relu(W1 @ x + b1) + b2).
    """
    B, C, L = x_ncl.shape
    H = w1.shape[0]
    itemsize = x_ncl.dtype.itemsize

    tb, tl = _choose_tiles(B, C, L, itemsize, tl_max, target_block_bytes)
    grid = (pl.cdiv(B, tb), pl.cdiv(L, tl))

    b1_col = b1.reshape(H, 1)
    b2_col = b2.reshape(C, 1)

    # VMEM budget: double-buffered x + out blocks, resident weights, and the
    # (H, tl)/(C, tl) f32 intermediates, with headroom.  Capped under v7x's
    # 64 MiB physical VMEM (v5e/v6e have 128 MiB, so the cap is always safe).
    block_bytes = tb * C * tl * itemsize
    interm_bytes = 2 * (C + H) * tl * 4
    weight_bytes = (2 * H * C + H + C) * 4
    vmem_limit = int(min(48 << 20,
                         max(16 << 20,
                             4 * block_bytes + interm_bytes + weight_bytes + (8 << 20))))

    cost = pl.CostEstimate(
        flops=4 * B * L * C * H,                  # two (C x H) matmuls per position
        transcendentals=B * L * C,                # sigmoid (one tanh per element)
        bytes_accessed=2 * B * C * L * itemsize   # stream x in, out back
        + weight_bytes,                           # weights/biases (once)
    )

    return pl.pallas_call(
        _cse_kernel,
        out_shape=jax.ShapeDtypeStruct((B, C, L), x_ncl.dtype),
        grid_spec=pltpu.PrefetchScalarGridSpec(
            num_scalar_prefetch=0,
            grid=grid,
            in_specs=[
                pl.BlockSpec((tb, C, tl), lambda b, l: (b, 0, l)),   # x tile (NCL)
                pl.BlockSpec((H, C), lambda b, l: (0, 0)),           # W1 (resident)
                pl.BlockSpec((H, 1), lambda b, l: (0, 0)),           # b1
                pl.BlockSpec((C, H), lambda b, l: (0, 0)),           # W2 (resident)
                pl.BlockSpec((C, 1), lambda b, l: (0, 0)),           # b2
            ],
            out_specs=pl.BlockSpec((tb, C, tl), lambda b, l: (b, 0, l)),
        ),
        compiler_params=pltpu.CompilerParams(
            dimension_semantics=("parallel", "parallel"),
            vmem_limit_bytes=vmem_limit,
        ),
        cost_estimate=cost,
    )(x_ncl, w1, b1_col, w2, b2_col)


def _reference(x_ncl, w1, b1, w2, b2):
    # Pure-JAX reference matching PyTorch semantics (NCL, 1x1 Conv1d).
    h = jnp.einsum("hc,bcl->bhl", w1, x_ncl) + b1[None, :, None]
    h = jnp.maximum(h, 0.0)
    s = jnp.einsum("ch,bhl->bcl", w2, h) + b2[None, :, None]
    s = jax.nn.sigmoid(s)
    return x_ncl + x_ncl * s


if __name__ == "__main__":
    # Small shapes consistent with the module: in_channels=128, reduction=8 -> hidden=16.
    B, C, L = 2, 128, 256
    reduction = 8
    H = C // reduction

    key = jax.random.PRNGKey(0)
    kx, k1, k2, k3, k4 = jax.random.split(key, 5)
    x = jax.random.normal(kx, (B, C, L), dtype=jnp.float32)

    # Deterministic parameter init (Conv1d kernel-size-1 weights, squeezed to 2D).
    w1 = jax.random.normal(k1, (H, C), dtype=jnp.float32) * 0.05
    b1 = jax.random.normal(k2, (H,), dtype=jnp.float32) * 0.05
    w2 = jax.random.normal(k3, (C, H), dtype=jnp.float32) * 0.05
    b2 = jax.random.normal(k4, (C,), dtype=jnp.float32) * 0.05

    out = cse_module(x, w1, b1, w2, b2)
    out = jax.block_until_ready(out)

    ref = _reference(x, w1, b1, w2, b2)
    assert out.shape == (B, C, L)
    assert jnp.allclose(out, ref, atol=1e-4, rtol=1e-4), "mismatch vs reference"

    print("KERNEL_OK")
</pallas_src>

<mosaic_0001>
module attributes {stable_mosaic.version = 11 : i64} {
  func.func @_cse_kernel(%arg0: i32, %arg1: i32, %arg2: memref<1x128x256xf32, #tpu.memory_space<vmem>>, %arg3: memref<16x128xf32, #tpu.memory_space<vmem>>, %arg4: memref<16x1xf32, #tpu.memory_space<vmem>>, %arg5: memref<128x16xf32, #tpu.memory_space<vmem>>, %arg6: memref<128x1xf32, #tpu.memory_space<vmem>>, %arg7: memref<1x128x256xf32, #tpu.memory_space<vmem>>) attributes {dimension_semantics = [#tpu.dimension_semantics<parallel>, #tpu.dimension_semantics<parallel>], iteration_bounds = array<i64: 2, 1>, scalar_prefetch = 0 : i64, scratch_operands = 0 : i64, tpu.core_type = #tpu.core_type<tc>, window_params = [{transform_indices = @transform_0, window_bounds = array<i64: 1, 128, 256>}, {pipeline_mode = #tpu.pipeline_mode<synchronous>, transform_indices = @transform_1, window_bounds = array<i64: 16, 128>}, {pipeline_mode = #tpu.pipeline_mode<synchronous>, transform_indices = @transform_2, window_bounds = array<i64: 16, 1>}, {pipeline_mode = #tpu.pipeline_mode<synchronous>, transform_indices = @transform_3, window_bounds = array<i64: 128, 16>}, {pipeline_mode = #tpu.pipeline_mode<synchronous>, transform_indices = @transform_4, window_bounds = array<i64: 128, 1>}, {transform_indices = @transform_5, window_bounds = array<i64: 1, 128, 256>}]} {
    %c0 = arith.constant 0 : index
    %c0_0 = arith.constant 0 : index
    %0 = vector.load %arg3[%c0, %c0_0] : memref<16x128xf32, #tpu.memory_space<vmem>>, vector<16x128xf32>
    %c0_1 = arith.constant 0 : index
    %c0_2 = arith.constant 0 : index
    %1 = vector.load %arg4[%c0_1, %c0_2] : memref<16x1xf32, #tpu.memory_space<vmem>>, vector<16x1xf32>
    %c0_3 = arith.constant 0 : index
    %c0_4 = arith.constant 0 : index
    %2 = vector.load %arg5[%c0_3, %c0_4] : memref<128x16xf32, #tpu.memory_space<vmem>>, vector<128x16xf32>
    %c0_5 = arith.constant 0 : index
    %c0_6 = arith.constant 0 : index
    %3 = vector.load %arg6[%c0_5, %c0_6] : memref<128x1xf32, #tpu.memory_space<vmem>>, vector<128x1xf32>
    %c0_7 = arith.constant 0 : index
    %c0_8 = arith.constant 0 : index
    %c0_9 = arith.constant 0 : index
    %4 = vector.load %arg2[%c0_7, %c0_8, %c0_9] : memref<1x128x256xf32, #tpu.memory_space<vmem>>, vector<1x128x256xf32>
    %5 = vector.shape_cast %4 : vector<1x128x256xf32> to vector<128x256xf32>
    %cst = arith.constant dense<0.000000e+00> : vector<16x256xf32>
    %6 = tpu.matmul %0, %5, %cst {dimension_numbers = #tpu.dot_dimension_numbers<[1], [0], [0], [1], [0, 0, 1, 1], [], []>} : vector<16x128xf32>, vector<128x256xf32>, vector<16x256xf32> -> vector<16x256xf32>
    %7 = vector.broadcast %1 : vector<16x1xf32> to vector<16x256xf32>
    %8 = arith.addf %6, %7 : vector<16x256xf32>
    %cst_10 = arith.constant 0.000000e+00 : f32
    %9 = vector.broadcast %cst_10 : f32 to vector<16x256xf32>
    %10 = arith.maximumf %8, %9 : vector<16x256xf32>
    %cst_11 = arith.constant dense<0.000000e+00> : vector<128x256xf32>
    %11 = tpu.matmul %2, %10, %cst_11 {dimension_numbers = #tpu.dot_dimension_numbers<[1], [0], [0], [1], [0, 0, 1, 1], [], []>} : vector<128x16xf32>, vector<16x256xf32>, vector<128x256xf32> -> vector<128x256xf32>
    %12 = vector.broadcast %3 : vector<128x1xf32> to vector<128x256xf32>
    %13 = arith.addf %11, %12 : vector<128x256xf32>
    %cst_12 = arith.constant 5.000000e-01 : f32
    %14 = vector.broadcast %cst_12 : f32 to vector<128x256xf32>
    %15 = arith.mulf %14, %13 : vector<128x256xf32>
    %16 = math.tanh %15 : vector<128x256xf32>
    %cst_13 = arith.constant 1.000000e+00 : f32
    %17 = vector.broadcast %cst_13 : f32 to vector<128x256xf32>
    %18 = arith.addf %16, %17 : vector<128x256xf32>
    %cst_14 = arith.constant 5.000000e-01 : f32
    %19 = vector.broadcast %cst_14 : f32 to vector<128x256xf32>
    %20 = arith.mulf %19, %18 : vector<128x256xf32>
    %cst_15 = arith.constant 1.000000e+00 : f32
    %21 = vector.broadcast %cst_15 : f32 to vector<128x256xf32>
    %22 = arith.addf %21, %20 : vector<128x256xf32>
    %23 = arith.mulf %5, %22 : vector<128x256xf32>
    %c0_16 = arith.constant 0 : index
    %c0_17 = arith.constant 0 : index
    %c0_18 = arith.constant 0 : index
    %24 = vector.load %arg7[%c0_16, %c0_17, %c0_18] : memref<1x128x256xf32, #tpu.memory_space<vmem>>, vector<1x128x256xf32>
    %25 = vector.shape_cast %24 : vector<1x128x256xf32> to vector<128x256xf32>
    %26 = vector.shape_cast %23 : vector<128x256xf32> to vector<1x128x256xf32>
    tpu.vector_store %arg7[%c0_16, %c0_17, %c0_18], %26 {strides = array<i32>} : memref<1x128x256xf32, #tpu.memory_space<vmem>>, vector<1x128x256xf32>,
    return
  }
  func.func @transform_0(%arg0: i32, %arg1: i32) -> (i32, i32, i32) {
    %c0_i32 = arith.constant 0 : i32
    %c0_i32_0 = arith.constant 0 : i32
    return %arg0, %c0_i32, %arg1 : i32, i32, i32
  }
  func.func @transform_1(%arg0: i32, %arg1: i32) -> (i32, i32) {
    %c0_i32 = arith.constant 0 : i32
    %c0_i32_0 = arith.constant 0 : i32
    %c0_i32_1 = arith.constant 0 : i32
    return %c0_i32, %c0_i32_0 : i32, i32
  }
  func.func @transform_2(%arg0: i32, %arg1: i32) -> (i32, i32) {
    %c0_i32 = arith.constant 0 : i32
    %c0_i32_0 = arith.constant 0 : i32
    %c0_i32_1 = arith.constant 0 : i32
    return %c0_i32, %c0_i32_0 : i32, i32
  }
  func.func @transform_3(%arg0: i32, %arg1: i32) -> (i32, i32) {
    %c0_i32 = arith.constant 0 : i32
    %c0_i32_0 = arith.constant 0 : i32
    %c0_i32_1 = arith.constant 0 : i32
    return %c0_i32, %c0_i32_0 : i32, i32
  }
  func.func @transform_4(%arg0: i32, %arg1: i32) -> (i32, i32) {
    %c0_i32 = arith.constant 0 : i32
    %c0_i32_0 = arith.constant 0 : i32
    %c0_i32_1 = arith.constant 0 : i32
    return %c0_i32, %c0_i32_0 : i32, i32
  }
  func.func @transform_5(%arg0: i32, %arg1: i32) -> (i32, i32, i32) {
    %c0_i32 = arith.constant 0 : i32
    %c0_i32_0 = arith.constant 0 : i32
    return %arg0, %c0_i32, %arg1 : i32, i32, i32
  }
}

</mosaic_0001>

<llo_original>
// kernel: cse_module.1
$region0: #{cse_module.1}
  #allocation0 [shape = 'u32[]', space=smem, size = 0x4, offset = 0x4, fixed_abs, tag = 'smem constant byte address 0x4 - core index']
  #allocation1 [shape = 'u32[72,128]{1,0:T(1,128)}', space=vmem, size = 0x9000, scoped, tag = 'internal scratch']
  %s0 = inlined_call_operand.hbm [shape: f32[2,128,256], index: 0, kind: input, shape index: {}]
  %s1 = inlined_call_operand.vmem [shape: f32[16,128], index: 1, kind: input, shape index: {}]
  %s2 = inlined_call_operand.vmem [shape: f32[16,1], index: 2, kind: input, shape index: {}]
  %s3 = inlined_call_operand.vmem [shape: f32[128,16], index: 3, kind: input, shape index: {}]
  %s4 = inlined_call_operand.vmem [shape: f32[128,1], index: 4, kind: input, shape index: {}]
  %s5 = inlined_call_operand.hbm [shape: f32[2,128,256], index: 5, kind: output, shape index: {}]
  %s6 = sld [smem:[#allocation0]]
  $region57: #{cse_module.1} parent=0
    _
  %s8 = ssub.s32 1, %s6
  %s9 = scalar_select 0, %s8, %s6
  $region1: #{cse_module.1} parent=0
    #allocation2 [shape = 'u8[262144]{0}', space=vmem, size = 0x40000, scoped, tag = 'input window, operand 0']
    #allocation3 [shape = 's32[2]{0}', space=sflag, size = 0x8, scoped, tag = 'scoped memory for cse_module.1']
    #allocation4 [shape = 's32[2]{0}', space=sflag, size = 0x8, scoped, tag = 'scoped memory for cse_module.1']
    #allocation5 [shape = 'u8[262144]{0}', space=vmem, size = 0x40000, scoped, tag = 'output window, operand 0']
    %10 = vsyncpa [#allocation3], 0
    %s11 = scalar_lea.sflag [#allocation3], 1
    %12 = vsyncpa %s11, 0
    %13 = vsyncpa [#allocation4], 0
    %s14 = scalar_lea.sflag [#allocation4], 1
    %15 = vsyncpa %s14, 0
    loop: start=0, step=1, limit=4
    $region2: #{cse_module.1} parent=1 // loop_pre_header
      _
    $region3: #{cse_module.1} parent=1 // loop_header
      %s17 = sphi 0, %s21
      %p18 = scmp.ge.s32.totalorder %s17, 4
      %s24 = sphi 0, %s36
      %s25 = sphi 0, %s32
      %s26 = sphi 0, %s24
      %s27 = sphi 0, %s25
      %s28 = sphi 0, %s26
      %s29 = sphi 0, %s27
      %s41 = sphi 0, %s43
      %s44 = sphi 0, %s41
      %s45 = sphi 0, %s44
      %s61 = sphi 0, %s45
      %s65 = sphi 0, %s65
      %s67 = sphi 0, %s65
      %s68 = sphi 0, %s67
      %s82 = sphi 0, %s68
      %s86 = sphi 0, %s86
      %s88 = sphi 0, %s86
      %s89 = sphi 0, %s88
      %s103 = sphi 0, %s89
      %s107 = sphi 0, %s107
      %s109 = sphi 0, %s107
      %s110 = sphi 0, %s109
      %s124 = sphi 0, %s110
      %s128 = sphi 0, %s128
      %s130 = sphi 0, %s128
      %s131 = sphi 0, %s130
      %s145 = sphi 0, %s131
      %s153 = sphi 0, %s155
      %s156 = sphi 0, %s153
      %s157 = sphi 0, %s156
      %s173 = sphi 0, %s157
    $region4: #{cse_module.1} parent=1 // loop_header_branch
      %20 = sbr.rel (%p18) target = $region8
    $region5: #{cse_module.1} parent=1 // loop_body
      %s22 = ssub.s32 %s17, 1
      %s23 = ssub.s32 %s17, 2
      %s30 = sadd.s32 1, %s25
      %p31 = scmp.ge.s32.totalorder %s30, 1
      %s32 = scalar_select %p31, 0, %s30
      %s33 = sadd.s32 1, %s24
      %s34 = scalar_select %p31, %s33, %s24
      %p35 = scmp.ge.s32.totalorder %s34, 2
      %s36 = scalar_select %p35, 0, %s34
      %s37 = ssub.s32 %s24, %s36
      %s38 = ssub.s32 %s25, %s32
      %s39 = sor.u32 %s37, %s38
      %p40 = scmp.eq.s32.totalorder %s39, 0
      %s42 = sadd.s32 %s41, 1
      %s43 = scalar_select %p40, %s41, %s42
      %p46 = pneg %p40
      %p47 = scmp.eq.s32.totalorder %s17, 1
      %p48 = por %p46, %p47
      %p49 = scmp.ne.s32.totalorder %s41, %s44
      %p50 = scmp.eq.s32.totalorder %s17, 0
      %p51 = por %p49, %p50
      %p52 = scmp.ne.s32.totalorder %s41, %s44
      %p53 = scmp.eq.s32.totalorder %s22, 1
      %p54 = por %p52, %p53
      %p55 = scmp.ne.s32.totalorder %s44, %s45
      %p56 = scmp.eq.s32.totalorder %s22, 0
      %p57 = por %p55, %p56
      %p58 = scmp.ne.s32.totalorder %s44, %s45
      %p59 = scmp.eq.s32.totalorder %s23, 1
      %p60 = por %p58, %p59
      %p62 = scmp.ne.s32.totalorder %s45, %s61
      %p63 = scmp.eq.s32.totalorder %s23, 0
      %p64 = por %p62, %p63
      %s66 = sadd.s32 %s65, 1
      %p69 = scmp.eq.s32.totalorder %s17, 1
      %p70 = scmp.ne.s32.totalorder %s65, %s67
      %p71 = scmp.eq.s32.totalorder %s17, 0
      %p72 = por %p70, %p71
      %p73 = scmp.ne.s32.totalorder %s65, %s67
      %p74 = scmp.eq.s32.totalorder %s22, 1
      %p75 = por %p73, %p74
      %p76 = scmp.ne.s32.totalorder %s67, %s68
      %p77 = scmp.eq.s32.totalorder %s22, 0
      %p78 = por %p76, %p77
      %p79 = scmp.ne.s32.totalorder %s67, %s68
      %p80 = scmp.eq.s32.totalorder %s23, 1
      %p81 = por %p79, %p80
      %p83 = scmp.ne.s32.totalorder %s68, %s82
      %p84 = scmp.eq.s32.totalorder %s23, 0
      %p85 = por %p83, %p84
      %s87 = sadd.s32 %s86, 1
      %p90 = scmp.eq.s32.totalorder %s17, 1
      %p91 = scmp.ne.s32.totalorder %s86, %s88
      %p92 = scmp.eq.s32.totalorder %s17, 0
      %p93 = por %p91, %p92
      %p94 = scmp.ne.s32.totalorder %s86, %s88
      %p95 = scmp.eq.s32.totalorder %s22, 1
      %p96 = por %p94, %p95
      %p97 = scmp.ne.s32.totalorder %s88, %s89
      %p98 = scmp.eq.s32.totalorder %s22, 0
      %p99 = por %p97, %p98
      %p100 = scmp.ne.s32.totalorder %s88, %s89
      %p101 = scmp.eq.s32.totalorder %s23, 1
      %p102 = por %p100, %p101
      %p104 = scmp.ne.s32.totalorder %s89, %s103
      %p105 = scmp.eq.s32.totalorder %s23, 0
      %p106 = por %p104, %p105
      %s108 = sadd.s32 %s107, 1
      %p111 = scmp.eq.s32.totalorder %s17, 1
      %p112 = scmp.ne.s32.totalorder %s107, %s109
      %p113 = scmp.eq.s32.totalorder %s17, 0
      %p114 = por %p112, %p113
      %p115 = scmp.ne.s32.totalorder %s107, %s109
      %p116 = scmp.eq.s32.totalorder %s22, 1
      %p117 = por %p115, %p116
      %p118 = scmp.ne.s32.totalorder %s109, %s110
      %p119 = scmp.eq.s32.totalorder %s22, 0
      %p120 = por %p118, %p119
      %p121 = scmp.ne.s32.totalorder %s109, %s110
      %p122 = scmp.eq.s32.totalorder %s23, 1
      %p123 = por %p121, %p122
      %p125 = scmp.ne.s32.totalorder %s110, %s124
      %p126 = scmp.eq.s32.totalorder %s23, 0
      %p127 = por %p125, %p126
      %s129 = sadd.s32 %s128, 1
      %p132 = scmp.eq.s32.totalorder %s17, 1
      %p133 = scmp.ne.s32.totalorder %s128, %s130
      %p134 = scmp.eq.s32.totalorder %s17, 0
      %p135 = por %p133, %p134
      %p136 = scmp.ne.s32.totalorder %s128, %s130
      %p137 = scmp.eq.s32.totalorder %s22, 1
      %p138 = por %p136, %p137
      %p139 = scmp.ne.s32.totalorder %s130, %s131
      %p140 = scmp.eq.s32.totalorder %s22, 0
      %p141 = por %p139, %p140
      %p142 = scmp.ne.s32.totalorder %s130, %s131
      %p143 = scmp.eq.s32.totalorder %s23, 1
      %p144 = por %p142, %p143
      %p146 = scmp.ne.s32.totalorder %s131, %s145
      %p147 = scmp.eq.s32.totalorder %s23, 0
      %p148 = por %p146, %p147
      %s149 = ssub.s32 %s24, %s36
      %s150 = ssub.s32 %s25, %s32
      %s151 = sor.u32 %s149, %s150
      %p152 = scmp.eq.s32.totalorder %s151, 0
      %s154 = sadd.s32 %s153, 1
      %s155 = scalar_select %p152, %s153, %s154
      %p158 = pneg %p152
      %p159 = scmp.eq.s32.totalorder %s17, 1
      %p160 = por %p158, %p159
      %p161 = scmp.ne.s32.totalorder %s153, %s156
      %p162 = scmp.eq.s32.totalorder %s17, 0
      %p163 = por %p161, %p162
      %p164 = scmp.ne.s32.totalorder %s153, %s156
      %p165 = scmp.eq.s32.totalorder %s22, 1
      %p166 = por %p164, %p165
      %p167 = scmp.ne.s32.totalorder %s156, %s157
      %p168 = scmp.eq.s32.totalorder %s22, 0
      %p169 = por %p167, %p168
      %p170 = scmp.ne.s32.totalorder %s156, %s157
      %p171 = scmp.eq.s32.totalorder %s23, 1
      %p172 = por %p170, %p171
      %p174 = scmp.ne.s32.totalorder %s157, %s173
      %p175 = scmp.eq.s32.totalorder %s23, 0
      %p176 = por %p174, %p175
      %p177 = scmp.le.s32.totalorder 1, %s17
      %p178 = scmp.lt.s32.totalorder %s17, 3
      %p179 = pnand %p177, %p178
      %p180 = pneg %p179
      // Predicated region
      $region9: #{cse_module.1} parent=5 // pred_check
        _
      $region10: #{cse_module.1} parent=5 // pred_check_branch
        %182 = sbr.rel (%p179) target = $region12
      $region11: #{cse_module.1} parent=5 // pred_region
        %s183 = ssub.s32 %s17, 1
        // Predicated region
        $region13: #{cse_module.1} parent=11 // pred_check
          %p184 = pneg %p78
        $region14: #{cse_module.1} parent=11 // pred_check_branch
          %186 = sbr.rel (%p184) target = $region16
        $region15: #{cse_module.1} parent=11 // pred_region
          _
        $region16: #{cse_module.1} parent=11 // pred_fallthru
          _
        // Predicated region
        $region17: #{cse_module.1} parent=11 // pred_check
          %p187 = pneg %p99
        $region18: #{cse_module.1} parent=11 // pred_check_branch
          %189 = sbr.rel (%p187) target = $region20
        $region19: #{cse_module.1} parent=11 // pred_region
          _
        $region20: #{cse_module.1} parent=11 // pred_fallthru
          _
        // Predicated region
        $region21: #{cse_module.1} parent=11 // pred_check
          %p190 = pneg %p120
        $region22: #{cse_module.1} parent=11 // pred_check_branch
          %192 = sbr.rel (%p190) target = $region24
        $region23: #{cse_module.1} parent=11 // pred_region
          _
        $region24: #{cse_module.1} parent=11 // pred_fallthru
          _
        // Predicated region
        $region25: #{cse_module.1} parent=11 // pred_check
          %p193 = pneg %p141
        $region26: #{cse_module.1} parent=11 // pred_check_branch
          %195 = sbr.rel (%p193) target = $region28
        $region27: #{cse_module.1} parent=11 // pred_region
          _
        $region28: #{cse_module.1} parent=11 // pred_fallthru
          _
      $region12: #{cse_module.1} parent=5 // pred_fallthru
        _
      %p196 = scmp.lt.s32.totalorder %s17, 2
      // Predicated region
      $region29: #{cse_module.1} parent=5 // pred_check
        %p197 = pneg %p196
      $region30: #{cse_module.1} parent=5 // pred_check_branch
        %199 = sbr.rel (%p197) target = $region32
      $region31: #{cse_module.1} parent=5 // pred_region
        // Predicated region
        $region33: #{cse_module.1} parent=31 // pred_check
          %p200 = pneg %p51
        $region34: #{cse_module.1} parent=31 // pred_check_branch
          %202 = sbr.rel (%p200) target = $region36
        $region35: #{cse_module.1} parent=31 // pred_region
          %s203 = sand.u32 %s41, 1
          %s204 = scalar_lea.sflag [#allocation3], %s203
          %s205 = sand.u32 %s41, 1
          %s206 = smul.addr %s205, 256
          %s207 = scalar_lea.vmem [#allocation2], %s206
          %s208 = smul.u32 2, %s25
          %210 = vsyncadd %s204, 0
          %s211 = smul.addr %s24, 32
          %s212 = sadd.s32 %s208, %s211
          %s213 = smul.addr %s212, 8
          %s214 = scalar_lea.hbm %s0, %s213
          %s215 = sshll.u32 %s214, 4
          %s216 = int_to_ptr.hbm [resolvable:$true] %s215
          %s217 = sshll.u32 %s207, 4
          %s218 = int_to_ptr.vmem [resolvable:$true] %s217
          %223 = dma.hbm_to_vmem [thread:$0]  %s216, 4096, %s218, %s204, 256, 256, 16
        $region36: #{cse_module.1} parent=31 // pred_fallthru
          _
      $region32: #{cse_module.1} parent=5 // pred_fallthru
        _
      %p224 = scmp.le.s32.totalorder 1, %s17
      %p225 = scmp.lt.s32.totalorder %s17, 3
      %p226 = pnand %p224, %p225
      %p227 = pneg %p226
      // Predicated region
      $region37: #{cse_module.1} parent=5 // pred_check
        _
      $region38: #{cse_module.1} parent=5 // pred_check_branch
        %229 = sbr.rel (%p226) target = $region40
      $region39: #{cse_module.1} parent=5 // pred_region
        %s230 = ssub.s32 %s17, 1
        %s231 = sand.u32 %s44, 1
        %s232 = scalar_lea.sflag [#allocation3], %s231
        %s233 = sand.u32 %s44, 1
        %s234 = smul.addr %s233, 256
        %s235 = scalar_lea.vmem [#allocation2], %s234
        // Predicated region
        $region41: #{cse_module.1} parent=39 // pred_check
          %p236 = pneg %p57
        $region42: #{cse_module.1} parent=39 // pred_check_branch
          %238 = sbr.rel (%p236) target = $region44
        $region43: #{cse_module.1} parent=39 // pred_region
          %240 = dma.done %s232, 4096
        $region44: #{cse_module.1} parent=39 // pred_fallthru
          _
        %s241 = sand.u32 %s44, 1
        %s242 = scalar_lea.sflag [#allocation3], %s241
        %s243 = sand.u32 %s44, 1
        %s244 = smul.addr %s243, 256
        %s245 = scalar_lea.vmem [#allocation2], %s244
        %p246 = pneg %p57
        %p247 = pneg %p54
        %p248 = pneg %p78
        %p249 = pneg %p75
        %p250 = pneg %p99
        %p251 = pneg %p96
        %p252 = pneg %p120
        %p253 = pneg %p117
        %p254 = pneg %p141
        %p255 = pneg %p138
        %p256 = pneg %p169
        %p257 = pneg %p166
        %s258 = sand.u32 %s156, 1
        %s259 = scalar_lea.sflag [#allocation4], %s258
        %s260 = sand.u32 %s156, 1
        %s261 = smul.addr %s260, 256
        %s262 = scalar_lea.vmem [#allocation5], %s261
        %s263 = smul.u32 2, %s27
        %s264 = smul.u32 2, %s27
        %v265 = vld [vmem:[%s1] sm:$0xff]
        %v266 = vld [vmem:[%s1 + $0x8] sm:$0xff]
        %v267 = vld [vmem:[%s2] sm:$0xff]
        %v268 = vld [vmem:[%s2 + $0x8] sm:$0xff]
        %v269 = vld [vmem:[%s3] sm:$0xff]
        %v270 = vld [vmem:[%s3 + $0x8] sm:$0xff]
        %v271 = vld [vmem:[%s3 + $0x10] sm:$0xff]
        %v272 = vld [vmem:[%s3 + $0x18] sm:$0xff]
        %v273 = vld [vmem:[%s3 + $0x20] sm:$0xff]
        %v274 = vld [vmem:[%s3 + $0x28] sm:$0xff]
        %v275 = vld [vmem:[%s3 + $0x30] sm:$0xff]
        %v276 = vld [vmem:[%s3 + $0x38] sm:$0xff]
        %v277 = vld [vmem:[%s3 + $0x40] sm:$0xff]
        %v278 = vld [vmem:[%s3 + $0x48] sm:$0xff]
        %v279 = vld [vmem:[%s3 + $0x50] sm:$0xff]
        %v280 = vld [vmem:[%s3 + $0x58] sm:$0xff]
        %v281 = vld [vmem:[%s3 + $0x60] sm:$0xff]
        %v282 = vld [vmem:[%s3 + $0x68] sm:$0xff]
        %v283 = vld [vmem:[%s3 + $0x70] sm:$0xff]
        %v284 = vld [vmem:[%s3 + $0x78] sm:$0xff]
        %v285 = vld [vmem:[%s4] sm:$0xff]
        %v286 = vld [vmem:[%s4 + $0x8] sm:$0xff]
        %v287 = vld [vmem:[%s4 + $0x10] sm:$0xff]
        %v288 = vld [vmem:[%s4 + $0x18] sm:$0xff]
        %v289 = vld [vmem:[%s4 + $0x20] sm:$0xff]
        %v290 = vld [vmem:[%s4 + $0x28] sm:$0xff]
        %v291 = vld [vmem:[%s4 + $0x30] sm:$0xff]
        %v292 = vld [vmem:[%s4 + $0x38] sm:$0xff]
        %v293 = vld [vmem:[%s4 + $0x40] sm:$0xff]
        %v294 = vld [vmem:[%s4 + $0x48] sm:$0xff]
        %v295 = vld [vmem:[%s4 + $0x50] sm:$0xff]
        %v296 = vld [vmem:[%s4 + $0x58] sm:$0xff]
        %v297 = vld [vmem:[%s4 + $0x60] sm:$0xff]
        %v298 = vld [vmem:[%s4 + $0x68] sm:$0xff]
        %v299 = vld [vmem:[%s4 + $0x70] sm:$0xff]
        %v300 = vld [vmem:[%s4 + $0x78] sm:$0xff]
        %v301 = vld [vmem:[%s235] sm:$0xff]
        %v302 = vld [vmem:[%s235 + $0x8] sm:$0xff]
        %v303 = vld [vmem:[%s235 + $0x10] sm:$0xff]
        %v304 = vld [vmem:[%s235 + $0x18] sm:$0xff]
        %v305 = vld [vmem:[%s235 + $0x20] sm:$0xff]
        %v306 = vld [vmem:[%s235 + $0x28] sm:$0xff]
        %v307 = vld [vmem:[%s235 + $0x30] sm:$0xff]
        %v308 = vld [vmem:[%s235 + $0x38] sm:$0xff]
        %v309 = vld [vmem:[%s235 + $0x40] sm:$0xff]
        %v310 = vld [vmem:[%s235 + $0x48] sm:$0xff]
        %v311 = vld [vmem:[%s235 + $0x50] sm:$0xff]
        %v312 = vld [vmem:[%s235 + $0x58] sm:$0xff]
        %v313 = vld [vmem:[%s235 + $0x60] sm:$0xff]
        %v314 = vld [vmem:[%s235 + $0x68] sm:$0xff]
        %v315 = vld [vmem:[%s235 + $0x70] sm:$0xff]
        %v316 = vld [vmem:[%s235 + $0x78] sm:$0xff]
        %v317 = vld [vmem:[%s235 + $0x80] sm:$0xff]
        %v318 = vld [vmem:[%s235 + $0x88] sm:$0xff]
        %v319 = vld [vmem:[%s235 + $0x90] sm:$0xff]
        %v320 = vld [vmem:[%s235 + $0x98] sm:$0xff]
        %v321 = vld [vmem:[%s235 + $0xa0] sm:$0xff]
        %v322 = vld [vmem:[%s235 + $0xa8] sm:$0xff]
        %v323 = vld [vmem:[%s235 + $0xb0] sm:$0xff]
        %v324 = vld [vmem:[%s235 + $0xb8] sm:$0xff]
        %v325 = vld [vmem:[%s235 + $0xc0] sm:$0xff]
        %v326 = vld [vmem:[%s235 + $0xc8] sm:$0xff]
        %v327 = vld [vmem:[%s235 + $0xd0] sm:$0xff]
        %v328 = vld [vmem:[%s235 + $0xd8] sm:$0xff]
        %v329 = vld [vmem:[%s235 + $0xe0] sm:$0xff]
        %v330 = vld [vmem:[%s235 + $0xe8] sm:$0xff]
        %v331 = vld [vmem:[%s235 + $0xf0] sm:$0xff]
        %v332 = vld [vmem:[%s235 + $0xf8] sm:$0xff]
        %334 = vset.pattern.permute.xlu0 0
        %335 = vperm.xlu0 %334, %v267
        %v336 = vpop.permute.xlu0 %335
        %339 = vset.pattern.permute.xlu0 0
        %340 = vperm.xlu0 %339, %v268
        %v341 = vpop.permute.xlu0 %340
        %343 = vmatpush.msra.mxu0 %v331
        %344 = vmatpush.msra.mxu0 %v329
        %345 = vmatpush.msra.mxu0 %v327
        %346 = vmatpush.msra.mxu0 %v325
        %347 = vmatpush.msra.mxu0 %v323
        %348 = vmatpush.msra.mxu0 %v321
        %349 = vmatpush.msra.mxu0 %v319
        %350 = vmatpush.msra.mxu0 %v317
        %351 = vmatpush.msra.mxu0 %v315
        %352 = vmatpush.msra.mxu0 %v313
        %353 = vmatpush.msra.mxu0 %v311
        %354 = vmatpush.msra.mxu0 %v309
        %355 = vmatpush.msra.mxu0 %v307
        %356 = vmatpush.msra.mxu0 %v305
        %357 = vmatpush.msra.mxu0 %v303
        %358 = vmatpush.msra.mxu0 %v301
        %359 = vmatmul.f32.gmra.mxu0 %v265
        %v360 = vpop.f32.mrf.mxu0
        %v361 = vadd.f32 %v336, %v360
        %362 = vmatmul.f32.gmra.mxu0 %v266
        %v363 = vpop.f32.mrf.mxu0
        %v364 = vadd.f32 %v341, %v363
        %365 = vdwg.mxu0
        %366 = vmatpush.msra.mxu0 %v332
        %367 = vmatpush.msra.mxu0 %v330
        %368 = vmatpush.msra.mxu0 %v328
        %369 = vmatpush.msra.mxu0 %v326
        %370 = vmatpush.msra.mxu0 %v324
        %371 = vmatpush.msra.mxu0 %v322
        %372 = vmatpush.msra.mxu0 %v320
        %373 = vmatpush.msra.mxu0 %v318
        %374 = vmatpush.msra.mxu0 %v316
        %375 = vmatpush.msra.mxu0 %v314
        %376 = vmatpush.msra.mxu0 %v312
        %377 = vmatpush.msra.mxu0 %v310
        %378 = vmatpush.msra.mxu0 %v308
        %379 = vmatpush.msra.mxu0 %v306
        %380 = vmatpush.msra.mxu0 %v304
        %381 = vmatpush.msra.mxu0 %v302
        %382 = vmatmul.f32.gmra.mxu0 %v265
        %v383 = vpop.f32.mrf.mxu0
        %v384 = vadd.f32 %v336, %v383
        %385 = vmatmul.f32.gmra.mxu0 %v266
        %v386 = vpop.f32.mrf.mxu0
        %v387 = vadd.f32 %v341, %v386
        %388 = vdwg.mxu0
        %v389 = vmax.f32 %v361, 0.0
        %v390 = vmax.f32 %v384, 0.0
        %v391 = vmax.f32 %v364, 0.0
        %v392 = vmax.f32 %v387, 0.0
        %394 = vset.pattern.permute.xlu0 0
        %395 = vperm.xlu0 %394, %v285
        %v396 = vpop.permute.xlu0 %395
        %399 = vset.pattern.permute.xlu0 0
        %400 = vperm.xlu0 %399, %v286
        %v401 = vpop.permute.xlu0 %400
        %404 = vset.pattern.permute.xlu0 0
        %405 = vperm.xlu0 %404, %v287
        %v406 = vpop.permute.xlu0 %405
        %409 = vset.pattern.permute.xlu0 0
        %410 = vperm.xlu0 %409, %v288
        %v411 = vpop.permute.xlu0 %410
        %414 = vset.pattern.permute.xlu0 0
        %415 = vperm.xlu0 %414, %v289
        %v416 = vpop.permute.xlu0 %415
        %419 = vset.pattern.permute.xlu0 0
        %420 = vperm.xlu0 %419, %v290
        %v421 = vpop.permute.xlu0 %420
        %424 = vset.pattern.permute.xlu0 0
        %425 = vperm.xlu0 %424, %v291
        %v426 = vpop.permute.xlu0 %425
        %429 = vset.pattern.permute.xlu0 0
        %430 = vperm.xlu0 %429, %v292
        %v431 = vpop.permute.xlu0 %430
        %434 = vset.pattern.permute.xlu0 0
        %435 = vperm.xlu0 %434, %v293
        %v436 = vpop.permute.xlu0 %435
        %439 = vset.pattern.permute.xlu0 0
        %440 = vperm.xlu0 %439, %v294
        %v441 = vpop.permute.xlu0 %440
        %444 = vset.pattern.permute.xlu0 0
        %445 = vperm.xlu0 %444, %v295
        %v446 = vpop.permute.xlu0 %445
        %449 = vset.pattern.permute.xlu0 0
        %450 = vperm.xlu0 %449, %v296
        %v451 = vpop.permute.xlu0 %450
        %454 = vset.pattern.permute.xlu0 0
        %455 = vperm.xlu0 %454, %v297
        %v456 = vpop.permute.xlu0 %455
        %459 = vset.pattern.permute.xlu0 0
        %460 = vperm.xlu0 %459, %v298
        %v461 = vpop.permute.xlu0 %460
        %464 = vset.pattern.permute.xlu0 0
        %465 = vperm.xlu0 %464, %v299
        %v466 = vpop.permute.xlu0 %465
        %469 = vset.pattern.permute.xlu0 0
        %470 = vperm.xlu0 %469, %v300
        %v471 = vpop.permute.xlu0 %470
        %vm473 = vcmask 130048
        %v475 = vsel %vm473, %v269, 0
        %v478 = vsel %vm473, %v270, 0
        %v481 = vsel %vm473, %v271, 0
        %v484 = vsel %vm473, %v272, 0
        %v487 = vsel %vm473, %v273, 0
        %v490 = vsel %vm473, %v274, 0
        %v493 = vsel %vm473, %v275, 0
        %v496 = vsel %vm473, %v276, 0
        %v499 = vsel %vm473, %v277, 0
        %v502 = vsel %vm473, %v278, 0
        %v505 = vsel %vm473, %v279, 0
        %v508 = vsel %vm473, %v280, 0
        %v511 = vsel %vm473, %v281, 0
        %v514 = vsel %vm473, %v282, 0
        %v517 = vsel %vm473, %v283, 0
        %v520 = vsel %vm473, %v284, 0
        %522 = vmatpush.msra.mxu0 0.0
        %523 = vmatpush.msra.mxu0 0.0
        %524 = vmatpush.msra.mxu0 0.0
        %525 = vmatpush.msra.mxu0 0.0
        %526 = vmatpush.msra.mxu0 0.0
        %527 = vmatpush.msra.mxu0 0.0
        %528 = vmatpush.msra.mxu0 0.0
        %529 = vmatpush.msra.mxu0 0.0
        %530 = vmatpush.msra.mxu0 0.0
        %531 = vmatpush.msra.mxu0 0.0
        %532 = vmatpush.msra.mxu0 0.0
        %533 = vmatpush.msra.mxu0 0.0
        %534 = vmatpush.msra.mxu0 0.0
        %535 = vmatpush.msra.mxu0 0.0
        %536 = vmatpush.msra.mxu0 %v391
        %537 = vmatpush.msra.mxu0 %v389
        %538 = vmatmul.f32.gmra.mxu0 %v475
        %v539 = vpop.f32.mrf.mxu0
        %v540 = vadd.f32 %v396, %v539
        %541 = vmatmul.f32.gmra.mxu0 %v478
        %v542 = vpop.f32.mrf.mxu0
        %v543 = vadd.f32 %v401, %v542
        %544 = vmatmul.f32.gmra.mxu0 %v481
        %v545 = vpop.f32.mrf.mxu0
        %v546 = vadd.f32 %v406, %v545
        %547 = vmatmul.f32.gmra.mxu0 %v484
        %v548 = vpop.f32.mrf.mxu0
        %v549 = vadd.f32 %v411, %v548
        %550 = vmatmul.f32.gmra.mxu0 %v487
        %v551 = vpop.f32.mrf.mxu0
        %v552 = vadd.f32 %v416, %v551
        %553 = vmatmul.f32.gmra.mxu0 %v490
        %v554 = vpop.f32.mrf.mxu0
        %v555 = vadd.f32 %v421, %v554
        %556 = vmatmul.f32.gmra.mxu0 %v493
        %v557 = vpop.f32.mrf.mxu0
        %v558 = vadd.f32 %v426, %v557
        %559 = vmatmul.f32.gmra.mxu0 %v496
        %v560 = vpop.f32.mrf.mxu0
        %v561 = vadd.f32 %v431, %v560
        %562 = vmatmul.f32.gmra.mxu0 %v499
        %v563 = vpop.f32.mrf.mxu0
        %v564 = vadd.f32 %v436, %v563
        %565 = vmatmul.f32.gmra.mxu0 %v502
        %v566 = vpop.f32.mrf.mxu0
        %v567 = vadd.f32 %v441, %v566
        %568 = vmatmul.f32.gmra.mxu0 %v505
        %v569 = vpop.f32.mrf.mxu0
        %v570 = vadd.f32 %v446, %v569
        %571 = vmatmul.f32.gmra.mxu0 %v508
        %v572 = vpop.f32.mrf.mxu0
        %v573 = vadd.f32 %v451, %v572
        %574 = vmatmul.f32.gmra.mxu0 %v511
        %v575 = vpop.f32.mrf.mxu0
        %v576 = vadd.f32 %v456, %v575
        %577 = vmatmul.f32.gmra.mxu0 %v514
        %v578 = vpop.f32.mrf.mxu0
        %v579 = vadd.f32 %v461, %v578
        %580 = vmatmul.f32.gmra.mxu0 %v517
        %v581 = vpop.f32.mrf.mxu0
        %v582 = vadd.f32 %v466, %v581
        %583 = vmatmul.f32.gmra.mxu0 %v520
        %v584 = vpop.f32.mrf.mxu0
        %v585 = vadd.f32 %v471, %v584
        %586 = vdwg.mxu0
        %587 = vmatpush.msra.mxu0 0.0
        %588 = vmatpush.msra.mxu0 0.0
        %589 = vmatpush.msra.mxu0 0.0
        %590 = vmatpush.msra.mxu0 0.0
        %591 = vmatpush.msra.mxu0 0.0
        %592 = vmatpush.msra.mxu0 0.0
        %593 = vmatpush.msra.mxu0 0.0
        %594 = vmatpush.msra.mxu0 0.0
        %595 = vmatpush.msra.mxu0 0.0
        %596 = vmatpush.msra.mxu0 0.0
        %597 = vmatpush.msra.mxu0 0.0
        %598 = vmatpush.msra.mxu0 0.0
        %599 = vmatpush.msra.mxu0 0.0
        %600 = vmatpush.msra.mxu0 0.0
        %601 = vmatpush.msra.mxu0 %v392
        %602 = vmatpush.msra.mxu0 %v390
        %603 = vmatmul.f32.gmra.mxu0 %v475
        %v604 = vpop.f32.mrf.mxu0
        %v605 = vadd.f32 %v396, %v604
        %606 = vmatmul.f32.gmra.mxu0 %v478
        %v607 = vpop.f32.mrf.mxu0
        %v608 = vadd.f32 %v401, %v607
        %609 = vmatmul.f32.gmra.mxu0 %v481
        %v610 = vpop.f32.mrf.mxu0
        %v611 = vadd.f32 %v406, %v610
        %612 = vmatmul.f32.gmra.mxu0 %v484
        %v613 = vpop.f32.mrf.mxu0
        %v614 = vadd.f32 %v411, %v613
        %615 = vmatmul.f32.gmra.mxu0 %v487
        %v616 = vpop.f32.mrf.mxu0
        %v617 = vadd.f32 %v416, %v616
        %618 = vmatmul.f32.gmra.mxu0 %v490
        %v619 = vpop.f32.mrf.mxu0
        %v620 = vadd.f32 %v421, %v619
        %621 = vmatmul.f32.gmra.mxu0 %v493
        %v622 = vpop.f32.mrf.mxu0
        %v623 = vadd.f32 %v426, %v622
        %624 = vmatmul.f32.gmra.mxu0 %v496
        %v625 = vpop.f32.mrf.mxu0
        %v626 = vadd.f32 %v431, %v625
        %627 = vmatmul.f32.gmra.mxu0 %v499
        %v628 = vpop.f32.mrf.mxu0
        %v629 = vadd.f32 %v436, %v628
        %630 = vmatmul.f32.gmra.mxu0 %v502
        %v631 = vpop.f32.mrf.mxu0
        %v632 = vadd.f32 %v441, %v631
        %633 = vmatmul.f32.gmra.mxu0 %v505
        %v634 = vpop.f32.mrf.mxu0
        %v635 = vadd.f32 %v446, %v634
        %636 = vmatmul.f32.gmra.mxu0 %v508
        %v637 = vpop.f32.mrf.mxu0
        %v638 = vadd.f32 %v451, %v637
        %639 = vmatmul.f32.gmra.mxu0 %v511
        %v640 = vpop.f32.mrf.mxu0
        %v641 = vadd.f32 %v456, %v640
        %642 = vmatmul.f32.gmra.mxu0 %v514
        %v643 = vpop.f32.mrf.mxu0
        %v644 = vadd.f32 %v461, %v643
        %645 = vmatmul.f32.gmra.mxu0 %v517
        %v646 = vpop.f32.mrf.mxu0
        %v647 = vadd.f32 %v466, %v646
        %648 = vmatmul.f32.gmra.mxu0 %v520
        %v649 = vpop.f32.mrf.mxu0
        %v650 = vadd.f32 %v471, %v649
        %651 = vdwg.mxu0
        %v652 = vmul.f32 %v540, 0.5
        %v653 = vmul.f32 %v605, 0.5
        %v654 = vmul.f32 %v543, 0.5
        %v655 = vmul.f32 %v608, 0.5
        %v656 = vmul.f32 %v546, 0.5
        %v657 = vmul.f32 %v611, 0.5
        %v658 = vmul.f32 %v549, 0.5
        %v659 = vmul.f32 %v614, 0.5
        %v660 = vmul.f32 %v552, 0.5
        %v661 = vmul.f32 %v617, 0.5
        %v662 = vmul.f32 %v555, 0.5
        %v663 = vmul.f32 %v620, 0.5
        %v664 = vmul.f32 %v558, 0.5
        %v665 = vmul.f32 %v623, 0.5
        %v666 = vmul.f32 %v561, 0.5
        %v667 = vmul.f32 %v626, 0.5
        %v668 = vmul.f32 %v564, 0.5
        %v669 = vmul.f32 %v629, 0.5
        %v670 = vmul.f32 %v567, 0.5
        %v671 = vmul.f32 %v632, 0.5
        %v672 = vmul.f32 %v570, 0.5
        %v673 = vmul.f32 %v635, 0.5
        %v674 = vmul.f32 %v573, 0.5
        %v675 = vmul.f32 %v638, 0.5
        %v676 = vmul.f32 %v576, 0.5
        %v677 = vmul.f32 %v641, 0.5
        %v678 = vmul.f32 %v579, 0.5
        %v679 = vmul.f32 %v644, 0.5
        %v680 = vmul.f32 %v582, 0.5
        %v681 = vmul.f32 %v647, 0.5
        %v682 = vmul.f32 %v585, 0.5
        %v683 = vmul.f32 %v650, 0.5
        %v684 = vtanh.pop %v652
        %v685 = vtanh.pop %v653
        %v686 = vtanh.pop %v654
        %v687 = vtanh.pop %v655
        %v688 = vtanh.pop %v656
        %v689 = vtanh.pop %v657
        %v690 = vtanh.pop %v658
        %v691 = vtanh.pop %v659
        %v692 = vtanh.pop %v660
        %v693 = vtanh.pop %v661
        %v694 = vtanh.pop %v662
        %v695 = vtanh.pop %v663
        %v696 = vtanh.pop %v664
        %v697 = vtanh.pop %v665
        %v698 = vtanh.pop %v666
        %v699 = vtanh.pop %v667
        %v700 = vtanh.pop %v668
        %v701 = vtanh.pop %v669
        %v702 = vtanh.pop %v670
        %v703 = vtanh.pop %v671
        %v704 = vtanh.pop %v672
        %v705 = vtanh.pop %v673
        %v706 = vtanh.pop %v674
        %v707 = vtanh.pop %v675
        %v708 = vtanh.pop %v676
        %v709 = vtanh.pop %v677
        %v710 = vtanh.pop %v678
        %v711 = vtanh.pop %v679
        %v712 = vtanh.pop %v680
        %v713 = vtanh.pop %v681
        %v714 = vtanh.pop %v682
        %v715 = vtanh.pop %v683
        %v716 = vadd.f32 %v684, 1.0
        %v717 = vadd.f32 %v685, 1.0
        %v718 = vadd.f32 %v686, 1.0
        %v719 = vadd.f32 %v687, 1.0
        %v720 = vadd.f32 %v688, 1.0
        %v721 = vadd.f32 %v689, 1.0
        %v722 = vadd.f32 %v690, 1.0
        %v723 = vadd.f32 %v691, 1.0
        %v724 = vadd.f32 %v692, 1.0
        %v725 = vadd.f32 %v693, 1.0
        %v726 = vadd.f32 %v694, 1.0
        %v727 = vadd.f32 %v695, 1.0
        %v728 = vadd.f32 %v696, 1.0
        %v729 = vadd.f32 %v697, 1.0
        %v730 = vadd.f32 %v698, 1.0
        %v731 = vadd.f32 %v699, 1.0
        %v732 = vadd.f32 %v700, 1.0
        %v733 = vadd.f32 %v701, 1.0
        %v734 = vadd.f32 %v702, 1.0
        %v735 = vadd.f32 %v703, 1.0
        %v736 = vadd.f32 %v704, 1.0
        %v737 = vadd.f32 %v705, 1.0
        %v738 = vadd.f32 %v706, 1.0
        %v739 = vadd.f32 %v707, 1.0
        %v740 = vadd.f32 %v708, 1.0
        %v741 = vadd.f32 %v709, 1.0
        %v742 = vadd.f32 %v710, 1.0
        %v743 = vadd.f32 %v711, 1.0
        %v744 = vadd.f32 %v712, 1.0
        %v745 = vadd.f32 %v713, 1.0
        %v746 = vadd.f32 %v714, 1.0
        %v747 = vadd.f32 %v715, 1.0
        %v748 = vmul.f32 %v716, 0.5
        %v749 = vmul.f32 %v717, 0.5
        %v750 = vmul.f32 %v718, 0.5
        %v751 = vmul.f32 %v719, 0.5
        %v752 = vmul.f32 %v720, 0.5
        %v753 = vmul.f32 %v721, 0.5
        %v754 = vmul.f32 %v722, 0.5
        %v755 = vmul.f32 %v723, 0.5
        %v756 = vmul.f32 %v724, 0.5
        %v757 = vmul.f32 %v725, 0.5
        %v758 = vmul.f32 %v726, 0.5
        %v759 = vmul.f32 %v727, 0.5
        %v760 = vmul.f32 %v728, 0.5
        %v761 = vmul.f32 %v729, 0.5
        %v762 = vmul.f32 %v730, 0.5
        %v763 = vmul.f32 %v731, 0.5
        %v764 = vmul.f32 %v732, 0.5
        %v765 = vmul.f32 %v733, 0.5
        %v766 = vmul.f32 %v734, 0.5
        %v767 = vmul.f32 %v735, 0.5
        %v768 = vmul.f32 %v736, 0.5
        %v769 = vmul.f32 %v737, 0.5
        %v770 = vmul.f32 %v738, 0.5
        %v771 = vmul.f32 %v739, 0.5
        %v772 = vmul.f32 %v740, 0.5
        %v773 = vmul.f32 %v741, 0.5
        %v774 = vmul.f32 %v742, 0.5
        %v775 = vmul.f32 %v743, 0.5
        %v776 = vmul.f32 %v744, 0.5
        %v777 = vmul.f32 %v745, 0.5
        %v778 = vmul.f32 %v746, 0.5
        %v779 = vmul.f32 %v747, 0.5
        %v780 = vadd.f32 %v748, 1.0
        %v781 = vadd.f32 %v749, 1.0
        %v782 = vadd.f32 %v750, 1.0
        %v783 = vadd.f32 %v751, 1.0
        %v784 = vadd.f32 %v752, 1.0
        %v785 = vadd.f32 %v753, 1.0
        %v786 = vadd.f32 %v754, 1.0
        %v787 = vadd.f32 %v755, 1.0
        %v788 = vadd.f32 %v756, 1.0
        %v789 = vadd.f32 %v757, 1.0
        %v790 = vadd.f32 %v758, 1.0
        %v791 = vadd.f32 %v759, 1.0
        %v792 = vadd.f32 %v760, 1.0
        %v793 = vadd.f32 %v761, 1.0
        %v794 = vadd.f32 %v762, 1.0
        %v795 = vadd.f32 %v763, 1.0
        %v796 = vadd.f32 %v764, 1.0
        %v797 = vadd.f32 %v765, 1.0
        %v798 = vadd.f32 %v766, 1.0
        %v799 = vadd.f32 %v767, 1.0
        %v800 = vadd.f32 %v768, 1.0
        %v801 = vadd.f32 %v769, 1.0
        %v802 = vadd.f32 %v770, 1.0
        %v803 = vadd.f32 %v771, 1.0
        %v804 = vadd.f32 %v772, 1.0
        %v805 = vadd.f32 %v773, 1.0
        %v806 = vadd.f32 %v774, 1.0
        %v807 = vadd.f32 %v775, 1.0
        %v808 = vadd.f32 %v776, 1.0
        %v809 = vadd.f32 %v777, 1.0
        %v810 = vadd.f32 %v778, 1.0
        %v811 = vadd.f32 %v779, 1.0
        %v812 = vmul.f32 %v301, %v780
        %v813 = vmul.f32 %v302, %v781
        %v814 = vmul.f32 %v303, %v782
        %v815 = vmul.f32 %v304, %v783
        %v816 = vmul.f32 %v305, %v784
        %v817 = vmul.f32 %v306, %v785
        %v818 = vmul.f32 %v307, %v786
        %v819 = vmul.f32 %v308, %v787
        %v820 = vmul.f32 %v309, %v788
        %v821 = vmul.f32 %v310, %v789
        %v822 = vmul.f32 %v311, %v790
        %v823 = vmul.f32 %v312, %v791
        %v824 = vmul.f32 %v313, %v792
        %v825 = vmul.f32 %v314, %v793
        %v826 = vmul.f32 %v315, %v794
        %v827 = vmul.f32 %v316, %v795
        %v828 = vmul.f32 %v317, %v796
        %v829 = vmul.f32 %v318, %v797
        %v830 = vmul.f32 %v319, %v798
        %v831 = vmul.f32 %v320, %v799
        %v832 = vmul.f32 %v321, %v800
        %v833 = vmul.f32 %v322, %v801
        %v834 = vmul.f32 %v323, %v802
        %v835 = vmul.f32 %v324, %v803
        %v836 = vmul.f32 %v325, %v804
        %v837 = vmul.f32 %v326, %v805
        %v838 = vmul.f32 %v327, %v806
        %v839 = vmul.f32 %v328, %v807
        %v840 = vmul.f32 %v329, %v808
        %v841 = vmul.f32 %v330, %v809
        %v842 = vmul.f32 %v331, %v810
        %v843 = vmul.f32 %v332, %v811
        %844 = vst [vmem:[%s262] sm:$0xff] %v812
        %845 = vst [vmem:[%s262 + $0x8] sm:$0xff] %v813
        %846 = vst [vmem:[%s262 + $0x10] sm:$0xff] %v814
        %847 = vst [vmem:[%s262 + $0x18] sm:$0xff] %v815
        %848 = vst [vmem:[%s262 + $0x20] sm:$0xff] %v816
        %849 = vst [vmem:[%s262 + $0x28] sm:$0xff] %v817
        %850 = vst [vmem:[%s262 + $0x30] sm:$0xff] %v818
        %851 = vst [vmem:[%s262 + $0x38] sm:$0xff] %v819
        %852 = vst [vmem:[%s262 + $0x40] sm:$0xff] %v820
        %853 = vst [vmem:[%s262 + $0x48] sm:$0xff] %v821
        %854 = vst [vmem:[%s262 + $0x50] sm:$0xff] %v822
        %855 = vst [vmem:[%s262 + $0x58] sm:$0xff] %v823
        %856 = vst [vmem:[%s262 + $0x60] sm:$0xff] %v824
        %857 = vst [vmem:[%s262 + $0x68] sm:$0xff] %v825
        %858 = vst [vmem:[%s262 + $0x70] sm:$0xff] %v826
        %859 = vst [vmem:[%s262 + $0x78] sm:$0xff] %v827
        %860 = vst [vmem:[%s262 + $0x80] sm:$0xff] %v828
        %861 = vst [vmem:[%s262 + $0x88] sm:$0xff] %v829
        %862 = vst [vmem:[%s262 + $0x90] sm:$0xff] %v830
        %863 = vst [vmem:[%s262 + $0x98] sm:$0xff] %v831
        %864 = vst [vmem:[%s262 + $0xa0] sm:$0xff] %v832
        %865 = vst [vmem:[%s262 + $0xa8] sm:$0xff] %v833
        %866 = vst [vmem:[%s262 + $0xb0] sm:$0xff] %v834
        %867 = vst [vmem:[%s262 + $0xb8] sm:$0xff] %v835
        %868 = vst [vmem:[%s262 + $0xc0] sm:$0xff] %v836
        %869 = vst [vmem:[%s262 + $0xc8] sm:$0xff] %v837
        %870 = vst [vmem:[%s262 + $0xd0] sm:$0xff] %v838
        %871 = vst [vmem:[%s262 + $0xd8] sm:$0xff] %v839
        %872 = vst [vmem:[%s262 + $0xe0] sm:$0xff] %v840
        %873 = vst [vmem:[%s262 + $0xe8] sm:$0xff] %v841
        %874 = vst [vmem:[%s262 + $0xf0] sm:$0xff] %v842
        %875 = vst [vmem:[%s262 + $0xf8] sm:$0xff] %v843
        %s876 = sand.u32 %s156, 1
        %s877 = scalar_lea.sflag [#allocation4], %s876
        %s878 = sand.u32 %s156, 1
        %s879 = smul.addr %s878, 256
        %s880 = scalar_lea.vmem [#allocation5], %s879
        // Predicated region
        $region45: #{cse_module.1} parent=39 // pred_check
          %p881 = pneg %p166
        $region46: #{cse_module.1} parent=39 // pred_check_branch
          %883 = sbr.rel (%p881) target = $region48
        $region47: #{cse_module.1} parent=39 // pred_region
          %s884 = smul.u32 2, %s27
          %886 = vsyncadd %s877, 0
          %s887 = smul.addr %s26, 32
          %s888 = sadd.s32 %s884, %s887
          %s889 = smul.addr %s888, 8
          %s890 = scalar_lea.hbm %s5, %s889
          %s891 = sshll.u32 %s880, 4
          %s892 = int_to_ptr.vmem [resolvable:$true] %s891
          %s893 = sshll.u32 %s890, 4
          %s894 = int_to_ptr.hbm [resolvable:$true] %s893
          %899 = dma.vmem_to_hbm [thread:$0]  %s892, 4096, %s894, %s877, 256, 256, 16
        $region48: #{cse_module.1} parent=39 // pred_fallthru
          _
      $region40: #{cse_module.1} parent=5 // pred_fallthru
        _
      %p900 = scmp.le.s32.totalorder 2, %s17
      // Predicated region
      $region49: #{cse_module.1} parent=5 // pred_check
        %p901 = pneg %p900
      $region50: #{cse_module.1} parent=5 // pred_check_branch
        %903 = sbr.rel (%p901) target = $region52
      $region51: #{cse_module.1} parent=5 // pred_region
        %s904 = ssub.s32 %s17, 2
        // Predicated region
        $region53: #{cse_module.1} parent=51 // pred_check
          %p905 = pneg %p172
        $region54: #{cse_module.1} parent=51 // pred_check_branch
          %907 = sbr.rel (%p905) target = $region56
        $region55: #{cse_module.1} parent=51 // pred_region
          %s908 = sand.u32 %s157, 1
          %s909 = scalar_lea.sflag [#allocation4], %s908
          %s910 = sand.u32 %s157, 1
          %s911 = smul.addr %s910, 256
          %s912 = scalar_lea.vmem [#allocation5], %s911
          %914 = dma.done %s909, 4096
        $region56: #{cse_module.1} parent=51 // pred_fallthru
          _
      $region52: #{cse_module.1} parent=5 // pred_fallthru
        _
    $region6: #{cse_module.1} parent=1 // loop_footer
      %s21 = sadd.s32 1, %s17
    $region7: #{cse_module.1} parent=1 // loop_footer_branch
      %16 = sbr.rel target = $region3
    $region8: #{cse_module.1} parent=1 // loop_exit
      _
    %915 = vsyncpa [#allocation3], 1
    %s916 = scalar_lea.sflag [#allocation3], 1
    %917 = vsyncpa %s916, 1
    %918 = vsyncpa [#allocation4], 1
    %s919 = scalar_lea.sflag [#allocation4], 1
    %920 = vsyncpa %s919, 1

</llo_original>
